<compile_context>
chip_gen: v7x
topology: tpu7x:2x2x1
jax: 0.10.0
libtpu: 0.0.40
codegen_flags: <defaults>
</compile_context>

<pallas_src>
import functools

import jax
import jax.numpy as jnp
import numpy as np
from jax.experimental import pallas as pl
from jax.experimental.pallas import tpu as pltpu

_NEG_INF = -1e30  # bias for padded expert lanes -> softmax prob exactly 0


# --------------------------------------------------------------------------
# Kernel: logits = x @ W^T + b ; probs = softmax(logits); fused top-k epilogue
# --------------------------------------------------------------------------
def _router_kernel(x_ref, wt_ref, b_ref,
                   logits_ref, probs_ref, tkp_ref, tki_ref, *, n_real, k):
    x = x_ref[...]                       # (tm, D)      x dtype (f32 / bf16)
    wt = wt_ref[...]                     # (D, E_pad)   resident, x dtype
    b = b_ref[...]                       # (1, E_pad)   f32 (padded lanes -1e30)

    # f32 accumulation on the MXU regardless of input dtype
    logits = jnp.dot(x, wt, preferred_element_type=jnp.float32) + b   # (tm, E_pad)

    # numerically stable softmax along the lane-dense expert axis (exact divide)
    m = jnp.max(logits, axis=-1, keepdims=True)
    ex = jnp.exp(logits - m)
    denom = jnp.sum(ex, axis=-1, keepdims=True)
    probs = ex / denom                   # padded lanes underflow to exactly 0.0

    # store only the real expert lanes (unpadded outputs: no post-call slice,
    # no E_pad/E write amplification on an HBM-bound kernel)
    logits_ref[...] = logits[:, :n_real].astype(logits_ref.dtype)
    probs_ref[...] = probs[:, :n_real].astype(probs_ref.dtype)

    # fused per-token top-k: k rounds of lane-max + min-index argmax + mask.
    # Padded lanes are exactly 0.0 and have indices >= n_real, so with
    # k <= n_real they are never selected (min-index tie-break prefers real
    # experts even on exact-zero ties).
    ids = jax.lax.broadcasted_iota(jnp.int32, probs.shape, 1)
    work = probs
    tkp_cols, tki_cols = [], []
    for _ in range(k):
        best = jnp.max(work, axis=-1, keepdims=True)                    # (tm, 1)
        best_id = jnp.min(
            jnp.where(work == best, ids, jnp.int32(probs.shape[-1])),
            axis=-1, keepdims=True)                                      # (tm, 1)
        tkp_cols.append(best)
        tki_cols.append(best_id)
        work = jnp.where(ids == best_id, -1.0, work)                     # mask chosen
    tkp_ref[...] = jnp.concatenate(tkp_cols, axis=-1).astype(tkp_ref.dtype)
    tki_ref[...] = jnp.concatenate(tki_cols, axis=-1)


# --------------------------------------------------------------------------
# VMEM budget & tile selection (budget-aware, generation-aware)
# --------------------------------------------------------------------------
def _round_up(a, b):
    return ((a + b - 1) // b) * b


def _vmem_budget():
    """Returns (vmem_limit_bytes, tile_budget_bytes)."""
    phys = 64 * 1024 * 1024                      # conservative default (v7x per-TC)
    try:
        info = pltpu.get_tpu_info()
        phys = int(getattr(info, "vmem_capacity_bytes", phys)) or phys
    except Exception:
        pass
    # ~half of physical VMEM: 64 MiB on v5e/v6e (128 MiB), 32 MiB on v7x (64 MiB/TC)
    limit = min(max(phys // 2, 32 * 1024 * 1024), 100 * 1024 * 1024)
    tile_budget = max(limit - 8 * 1024 * 1024, 16 * 1024 * 1024)  # headroom for internals
    return limit, tile_budget


def _choose_token_tile(T, D, E, E_pad, k, x_isz, out_isz, budget):
    granule = {1: 32, 2: 16}.get(x_isz, 8)        # sublane packing granule per dtype
    t_ceil = _round_up(T, granule)
    resident = D * E_pad * x_isz + 8 * E_pad * 4  # single-buffered weight + bias
    # double-buffered per-token bytes: streamed x + 4 outputs
    per_tok = 2 * (D * x_isz + 2 * E * out_isz + k * 8)
    avail = max(budget - resident, per_tok * granule)
    tm = avail // per_tok
    tm = min(tm, 4096)                            # per-step overhead amortized well before this
    # keep >=2 grid steps when T allows it (v7x: 2 TCs share the "parallel" axis)
    tm = min(tm, max(_round_up((T + 1) // 2, granule), granule))
    tm = max(granule, (tm // granule) * granule)
    tm = min(tm, t_ceil)
    # snap to a divisor of T (no token padding -> no output slice) if it costs < 2x
    if T % granule == 0 and T % tm != 0:
        cand = tm
        while cand > granule and T % cand != 0:
            cand -= granule
        if T % cand == 0 and 2 * cand >= tm:
            tm = cand
    return int(tm)


# --------------------------------------------------------------------------
# One-time parameter prep (outside the hot path)
# --------------------------------------------------------------------------
def prepare_router_params(weight, bias, compute_dtype=None):
    """Transpose + lane-pad the nn.Linear params ONCE.

    weight: (num_experts, d_model), bias: (num_experts,)
    Returns wt_pad (d_model, E_pad) in compute dtype, b_pad (1, E_pad) f32.
    Pass compute_dtype=jnp.bfloat16 in production (required for v5e).
    """
    E, D = weight.shape
    dt = jnp.dtype(compute_dtype) if compute_dtype is not None else weight.dtype
    E_pad = pl.cdiv(E, 128) * 128
    wt = weight.T.astype(dt)                                   # (D, E)
    if E_pad > E:
        wt = jnp.pad(wt, ((0, 0), (0, E_pad - E)))
        b = jnp.concatenate(
            [bias.astype(jnp.float32),
             jnp.full((E_pad - E,), _NEG_INF, dtype=jnp.float32)])
    else:
        b = bias.astype(jnp.float32)
    return wt, b.reshape(1, E_pad)


# --------------------------------------------------------------------------
# Pallas wrapper
# --------------------------------------------------------------------------
def _router_logits_probs_topk(x, wt_pad, b_pad, E, k):
    T, D = x.shape
    E_pad = wt_pad.shape[1]
    x_isz = jnp.dtype(x.dtype).itemsize
    out_dtype = x.dtype
    out_isz = jnp.dtype(out_dtype).itemsize

    limit, tile_budget = _vmem_budget()
    tm = _choose_token_tile(T, D, E, E_pad, k, x_isz, out_isz, tile_budget)
    T_pad = pl.cdiv(T, tm) * tm
    x_pad = jnp.pad(x, ((0, T_pad - T), (0, 0))) if T_pad > T else x

    cost = pl.CostEstimate(
        flops=2 * T_pad * D * E_pad,
        transcendentals=T_pad * E_pad,
        bytes_accessed=(T_pad * D * x_isz + D * E_pad * x_isz
                        + T_pad * (2 * E * out_isz + k * 8)),
    )

    logits, probs, topk_probs, topk_ids = pl.pallas_call(
        functools.partial(_router_kernel, n_real=E, k=k),
        out_shape=(
            jax.ShapeDtypeStruct((T_pad, E), out_dtype),    # logits (unpadded E)
            jax.ShapeDtypeStruct((T_pad, E), out_dtype),    # probs  (unpadded E)
            jax.ShapeDtypeStruct((T_pad, k), jnp.float32),  # top-k probs
            jax.ShapeDtypeStruct((T_pad, k), jnp.int32),    # top-k expert ids
        ),
        grid=(T_pad // tm,),
        in_specs=[
            pl.BlockSpec((tm, D), lambda i: (i, 0)),               # x: streamed tiles
            pl.BlockSpec(memory_space=pltpu.MemorySpace.VMEM),     # weight: resident, 1 copy
            pl.BlockSpec(memory_space=pltpu.MemorySpace.VMEM),     # bias:   resident, 1 copy
        ],
        out_specs=(
            pl.BlockSpec((tm, E), lambda i: (i, 0)),
            pl.BlockSpec((tm, E), lambda i: (i, 0)),
            pl.BlockSpec((tm, k), lambda i: (i, 0)),
            pl.BlockSpec((tm, k), lambda i: (i, 0)),
        ),
        compiler_params=pltpu.CompilerParams(
            dimension_semantics=("parallel",),   # megacore-shard token tiles on v7x
            vmem_limit_bytes=limit,
        ),
        cost_estimate=cost,
    )(x_pad, wt_pad, b_pad)
    return logits, probs, topk_probs, topk_ids


@functools.partial(jax.jit, static_argnames=("num_experts", "k", "expert_capacity"))
def topk_router_forward(x, wt_pad, b_pad, num_experts, k, expert_capacity):
    """
    x:      (num_tokens, d_model)
    wt_pad: (d_model, E_pad)  from prepare_router_params
    b_pad:  (1, E_pad) f32    from prepare_router_params
    Returns (logits, probs, expert_probs, expert_indices) matching the PyTorch
    module (expert_indices is int32 instead of int64; -1 marks unused slots).
    """
    T = x.shape[0]
    E = num_experts
    k = min(k, E)

    logits, probs, topk_probs, topk_ids = _router_logits_probs_topk(
        x, wt_pad, b_pad, E, k)

    # strip token padding if the tile did not divide T (tile choice avoids this
    # when possible; the top-k arrays are tiny either way)
    if logits.shape[0] != T:
        logits, probs = logits[:T], probs[:T]
        topk_probs, topk_ids = topk_probs[:T], topk_ids[:T]

    # ---- per-expert capacity-limited selection via ONE lexicographic sort ----
    # TODO(synk): this data-dependent sort/scatter has no clean dense-Pallas
    # equivalent at this size; kept as O(T*k) JAX glue.
    flat_e = topk_ids.reshape(-1)                                    # (T*k,) int32
    flat_p = topk_probs.reshape(-1)                                  # (T*k,) f32
    flat_t = jnp.repeat(jnp.arange(T, dtype=jnp.int32), k)           # (T*k,)

    # primary key: expert id ascending; secondary key: probability descending
    order = jnp.lexsort((-flat_p, flat_e))
    se = flat_e[order]
    sp = flat_p[order]
    st = flat_t[order]

    group_start = jnp.searchsorted(se, jnp.arange(E, dtype=jnp.int32))
    rank = jnp.arange(T * k, dtype=jnp.int32) - group_start[se].astype(jnp.int32)
    valid = rank < expert_capacity                  # keep first `capacity` per expert

    row = jnp.where(valid, se, E)                   # out-of-range rows -> dropped
    col = jnp.where(valid, rank, 0)

    expert_probs = jnp.zeros((E, expert_capacity), dtype=probs.dtype)
    expert_probs = expert_probs.at[row, col].set(sp.astype(probs.dtype), mode="drop")
    expert_indices = jnp.full((E, expert_capacity), -1, dtype=jnp.int32)
    expert_indices = expert_indices.at[row, col].set(st, mode="drop")

    return logits, probs, expert_probs, expert_indices


if __name__ == "__main__":
    # small, deterministic example: 8 tokens, d_model=32, 4 experts, k=2, cap=3
    num_tokens, d_model, num_experts = 8, 32, 4
    k, expert_capacity = 2, 3

    key = jax.random.PRNGKey(0)
    kx, kw, kb = jax.random.split(key, 3)
    x = jax.random.normal(kx, (num_tokens, d_model), dtype=jnp.float32)
    bound = 1.0 / (d_model ** 0.5)
    weight = jax.random.uniform(kw, (num_experts, d_model), dtype=jnp.float32,
                                minval=-bound, maxval=bound)
    bias = jax.random.uniform(kb, (num_experts,), dtype=jnp.float32,
                              minval=-bound, maxval=bound)

    # one-time param prep (transpose + lane-pad) OUTSIDE the hot path
    wt_pad, b_pad = prepare_router_params(weight, bias)

    logits, probs, expert_probs, expert_indices = topk_router_forward(
        x, wt_pad, b_pad, num_experts, k, expert_capacity)
    jax.block_until_ready((logits, probs, expert_probs, expert_indices))

    # ---- hot-path check vs a pure-JAX reference ----
    ref_logits = x @ weight.T + bias
    ref_probs = jax.nn.softmax(ref_logits, axis=-1)
    assert logits.shape == (num_tokens, num_experts)
    assert probs.shape == (num_tokens, num_experts)
    assert jnp.allclose(logits, ref_logits, atol=1e-4, rtol=1e-4), "logits mismatch"
    assert jnp.allclose(probs, ref_probs, atol=1e-4, rtol=1e-4), "probs mismatch"
    assert jnp.allclose(jnp.sum(probs, axis=-1), 1.0, atol=1e-5), "probs not normalized"

    # ---- glue check vs a literal Python port of the PyTorch loop, built on
    #      the kernel's own probs so the comparison is selection-exact ----
    p = np.asarray(probs)
    ref_ep = np.zeros((num_experts, expert_capacity), np.float32)
    ref_ei = np.full((num_experts, expert_capacity), -1, np.int64)
    flat = []
    for t in range(num_tokens):
        top = np.argsort(-p[t], kind="stable")[:k]
        for e in top:
            flat.append((t, int(e), float(p[t, e])))
    for e in range(num_experts):
        chosen = [(prob, t) for (t, ee, prob) in flat if ee == e]
        chosen.sort(key=lambda z: -z[0])
        for j, (prob, t) in enumerate(chosen[:expert_capacity]):
            ref_ep[e, j] = prob
            ref_ei[e, j] = t
    assert np.allclose(np.asarray(expert_probs), ref_ep, atol=1e-6), "expert_probs mismatch"
    assert np.array_equal(np.asarray(expert_indices, dtype=np.int64), ref_ei), \
        "expert_indices mismatch"

    assert expert_probs.shape == (num_experts, expert_capacity)
    assert expert_indices.shape == (num_experts, expert_capacity)

    print("KERNEL_OK")
</pallas_src>

<mosaic_0001>
module attributes {stable_mosaic.version = 11 : i64} {
  func.func @_router_kernel(%arg0: i32, %arg1: memref<8x32xf32, #tpu.memory_space<vmem>>, %arg2: memref<32x128xf32, #tpu.memory_space<vmem>>, %arg3: memref<1x128xf32, #tpu.memory_space<vmem>>, %arg4: memref<8x4xf32, #tpu.memory_space<vmem>>, %arg5: memref<8x4xf32, #tpu.memory_space<vmem>>, %arg6: memref<8x2xf32, #tpu.memory_space<vmem>>, %arg7: memref<8x2xi32, #tpu.memory_space<vmem>>) attributes {dimension_semantics = [#tpu.dimension_semantics<parallel>], iteration_bounds = array<i64: 1>, scalar_prefetch = 0 : i64, scratch_operands = 0 : i64, tpu.core_type = #tpu.core_type<tc>, window_params = [{transform_indices = @transform_0, window_bounds = array<i64: 8, 32>}, {pipeline_mode = #tpu.pipeline_mode<synchronous>, transform_indices = @transform_1, window_bounds = array<i64: 32, 128>}, {pipeline_mode = #tpu.pipeline_mode<synchronous>, transform_indices = @transform_2, window_bounds = array<i64: 1, 128>}, {transform_indices = @transform_3, window_bounds = array<i64: 8, 4>}, {transform_indices = @transform_4, window_bounds = array<i64: 8, 4>}, {transform_indices = @transform_5, window_bounds = array<i64: 8, 2>}, {transform_indices = @transform_6, window_bounds = array<i64: 8, 2>}]} {
    %c0 = arith.constant 0 : index
    %c0_0 = arith.constant 0 : index
    %0 = vector.load %arg1[%c0, %c0_0] : memref<8x32xf32, #tpu.memory_space<vmem>>, vector<8x32xf32>
    %c0_1 = arith.constant 0 : index
    %c0_2 = arith.constant 0 : index
    %1 = vector.load %arg2[%c0_1, %c0_2] : memref<32x128xf32, #tpu.memory_space<vmem>>, vector<32x128xf32>
    %c0_3 = arith.constant 0 : index
    %c0_4 = arith.constant 0 : index
    %2 = vector.load %arg3[%c0_3, %c0_4] : memref<1x128xf32, #tpu.memory_space<vmem>>, vector<1x128xf32>
    %cst = arith.constant dense<0.000000e+00> : vector<8x128xf32>
    %3 = tpu.matmul %0, %1, %cst {dimension_numbers = #tpu.dot_dimension_numbers<[1], [0], [0], [1], [0, 0, 1, 1], [], []>} : vector<8x32xf32>, vector<32x128xf32>, vector<8x128xf32> -> vector<8x128xf32>
    %4 = vector.broadcast %2 : vector<1x128xf32> to vector<8x128xf32>
    %5 = arith.addf %3, %4 : vector<8x128xf32>
    %cst_5 = arith.constant dense<0xFF800000> : vector<8xf32>
    %6 = vector.multi_reduction <maximumf>, %5, %cst_5 [1] : vector<8x128xf32> to vector<8xf32>
    %7 = vector.shape_cast %6 : vector<8xf32> to vector<8x1xf32>
    %8 = vector.broadcast %7 : vector<8x1xf32> to vector<8x128xf32>
    %9 = arith.subf %5, %8 : vector<8x128xf32>
    %10 = math.exp %9 : vector<8x128xf32>
    %cst_6 = arith.constant dense<0.000000e+00> : vector<8xf32>
    %11 = vector.multi_reduction <add>, %10, %cst_6 [1] : vector<8x128xf32> to vector<8xf32>
    %12 = vector.shape_cast %11 : vector<8xf32> to vector<8x1xf32>
    %13 = vector.broadcast %12 : vector<8x1xf32> to vector<8x128xf32>
    %14 = arith.divf %10, %13 : vector<8x128xf32>
    %15 = vector.extract_strided_slice %5 {offsets = [0, 0], sizes = [8, 4], strides = [1, 1]} : vector<8x128xf32> to vector<8x4xf32>
    %c0_7 = arith.constant 0 : index
    %c0_8 = arith.constant 0 : index
    %16 = vector.load %arg4[%c0_7, %c0_8] : memref<8x4xf32, #tpu.memory_space<vmem>>, vector<8x4xf32>
    tpu.vector_store %arg4[%c0_7, %c0_8], %15 {strides = array<i32>} : memref<8x4xf32, #tpu.memory_space<vmem>>, vector<8x4xf32>,
    %17 = vector.extract_strided_slice %14 {offsets = [0, 0], sizes = [8, 4], strides = [1, 1]} : vector<8x128xf32> to vector<8x4xf32>
    %c0_9 = arith.constant 0 : index
    %c0_10 = arith.constant 0 : index
    %18 = vector.load %arg5[%c0_9, %c0_10] : memref<8x4xf32, #tpu.memory_space<vmem>>, vector<8x4xf32>
    tpu.vector_store %arg5[%c0_9, %c0_10], %17 {strides = array<i32>} : memref<8x4xf32, #tpu.memory_space<vmem>>, vector<8x4xf32>,
    %19 = tpu.iota {dimensions = array<i32: 1>} : vector<8x128xi32>
    %cst_11 = arith.constant dense<0xFF800000> : vector<8xf32>
    %20 = vector.multi_reduction <maximumf>, %14, %cst_11 [1] : vector<8x128xf32> to vector<8xf32>
    %21 = vector.shape_cast %20 : vector<8xf32> to vector<8x1xf32>
    %22 = vector.broadcast %21 : vector<8x1xf32> to vector<8x128xf32>
    %23 = arith.cmpf oeq, %14, %22 : vector<8x128xf32>
    %c128_i32 = arith.constant 128 : i32
    %24 = vector.broadcast %c128_i32 : i32 to vector<8x128xi32>
    %25 = arith.select %23, %19, %24 : vector<8x128xi1>, vector<8x128xi32>
    %cst_12 = arith.constant dense<2147483647> : vector<8xi32>
    %26 = vector.multi_reduction <minsi>, %25, %cst_12 [1] : vector<8x128xi32> to vector<8xi32>
    %27 = vector.shape_cast %26 : vector<8xi32> to vector<8x1xi32>
    %28 = vector.broadcast %27 : vector<8x1xi32> to vector<8x128xi32>
    %29 = arith.cmpi eq, %19, %28 : vector<8x128xi32>
    %cst_13 = arith.constant -1.000000e+00 : f32
    %30 = vector.broadcast %cst_13 : f32 to vector<8x128xf32>
    %31 = arith.select %29, %30, %14 : vector<8x128xi1>, vector<8x128xf32>
    %cst_14 = arith.constant dense<0xFF800000> : vector<8xf32>
    %32 = vector.multi_reduction <maximumf>, %31, %cst_14 [1] : vector<8x128xf32> to vector<8xf32>
    %33 = vector.shape_cast %32 : vector<8xf32> to vector<8x1xf32>
    %34 = vector.broadcast %33 : vector<8x1xf32> to vector<8x128xf32>
    %35 = arith.cmpf oeq, %31, %34 : vector<8x128xf32>
    %c128_i32_15 = arith.constant 128 : i32
    %36 = vector.broadcast %c128_i32_15 : i32 to vector<8x128xi32>
    %37 = arith.select %35, %19, %36 : vector<8x128xi1>, vector<8x128xi32>
    %cst_16 = arith.constant dense<2147483647> : vector<8xi32>
    %38 = vector.multi_reduction <minsi>, %37, %cst_16 [1] : vector<8x128xi32> to vector<8xi32>
    %39 = vector.shape_cast %38 : vector<8xi32> to vector<8x1xi32>
    %40 = tpu.concatenate %21, %33 in 1 : vector<8x1xf32>, vector<8x1xf32> -> vector<8x2xf32>
    %c0_17 = arith.constant 0 : index
    %c0_18 = arith.constant 0 : index
    %41 = vector.load %arg6[%c0_17, %c0_18] : memref<8x2xf32, #tpu.memory_space<vmem>>, vector<8x2xf32>
    tpu.vector_store %arg6[%c0_17, %c0_18], %40 {strides = array<i32>} : memref<8x2xf32, #tpu.memory_space<vmem>>, vector<8x2xf32>,
    %42 = tpu.concatenate %27, %39 in 1 : vector<8x1xi32>, vector<8x1xi32> -> vector<8x2xi32>
    %c0_19 = arith.constant 0 : index
    %c0_20 = arith.constant 0 : index
    %43 = vector.load %arg7[%c0_19, %c0_20] : memref<8x2xi32, #tpu.memory_space<vmem>>, vector<8x2xi32>
    tpu.vector_store %arg7[%c0_19, %c0_20], %42 {strides = array<i32>} : memref<8x2xi32, #tpu.memory_space<vmem>>, vector<8x2xi32>,
    return
  }
  func.func @transform_0(%arg0: i32) -> (i32, i32) {
    %c0_i32 = arith.constant 0 : i32
    %c0_i32_0 = arith.constant 0 : i32
    return %arg0, %c0_i32 : i32, i32
  }
  func.func @transform_1(%arg0: i32) -> (i32, i32) {
    %c0_i32 = arith.constant 0 : i32
    %c0_i32_0 = arith.constant 0 : i32
    %c0_i32_1 = arith.constant 0 : i32
    return %c0_i32, %c0_i32_0 : i32, i32
  }
  func.func @transform_2(%arg0: i32) -> (i32, i32) {
    %c0_i32 = arith.constant 0 : i32
    %c0_i32_0 = arith.constant 0 : i32
    %c0_i32_1 = arith.constant 0 : i32
    return %c0_i32, %c0_i32_0 : i32, i32
  }
  func.func @transform_3(%arg0: i32) -> (i32, i32) {
    %c0_i32 = arith.constant 0 : i32
    %c0_i32_0 = arith.constant 0 : i32
    return %arg0, %c0_i32 : i32, i32
  }
  func.func @transform_4(%arg0: i32) -> (i32, i32) {
    %c0_i32 = arith.constant 0 : i32
    %c0_i32_0 = arith.constant 0 : i32
    return %arg0, %c0_i32 : i32, i32
  }
  func.func @transform_5(%arg0: i32) -> (i32, i32) {
    %c0_i32 = arith.constant 0 : i32
    %c0_i32_0 = arith.constant 0 : i32
    return %arg0, %c0_i32 : i32, i32
  }
  func.func @transform_6(%arg0: i32) -> (i32, i32) {
    %c0_i32 = arith.constant 0 : i32
    %c0_i32_0 = arith.constant 0 : i32
    return %arg0, %c0_i32 : i32, i32
  }
}

</mosaic_0001>

<llo_original>
// kernel: neg.1
$region0: #{neg.1}
  #allocation0 [shape = 's32[1]{0}', space=sflag, size = 0x4, scoped, tag = 'scoped memory for neg.1']
  %s0 = inlined_call_operand.vmem [shape: f32[16], index: 0, kind: input, shape index: {}]
  %s1 = inlined_call_operand.vmem [shape: f32[16], index: 1, kind: output, shape index: {}]
  %v2 = vld [vmem:[%s0] sm:$0x1]
  %3 = xla_tuple %v2
  %4 = xla_tuple %3
  %v5 = vxor.u32 %v2, 2147483648
  %6 = xla_tuple %v5
  %7 = vst [vmem:[%s1] sm:$0x1] %v5

// kernel: custom-call.4
$region0: #{custom-call.4}
  %s0 = inlined_call_operand.vmem [shape: u32[4], index: 0, kind: output, shape index: {}]

// kernel: topk_router_forward.1
$region0: #{topk_router_forward.1}
  #allocation0 [shape = 'u32[]', space=smem, size = 0x4, offset = 0x4, fixed_abs, tag = 'smem constant byte address 0x4 - core index']
  #allocation1 [shape = 'u32[144,128]{1,0:T(1,128)}', space=vmem, size = 0x12000, scoped, tag = 'internal scratch']
  %s0 = inlined_call_operand.hbm [shape: f32[8,32], index: 0, kind: input, shape index: {}]
  %s1 = inlined_call_operand.hbm [shape: f32[32,128], index: 1, kind: input, shape index: {}]
  %s2 = inlined_call_operand.hbm [shape: f32[1,128], index: 2, kind: input, shape index: {}]
  %s3 = inlined_call_operand.vmem [shape: f32[8,4], index: 3, kind: output, shape index: {0}]
  %s4 = inlined_call_operand.vmem [shape: f32[8,4], index: 4, kind: output, shape index: {1}]
  %s5 = inlined_call_operand.vmem [shape: f32[8,2], index: 5, kind: output, shape index: {2}]
  %s6 = inlined_call_operand.vmem [shape: s32[8,2], index: 6, kind: output, shape index: {3}]
  %7 = xla_tuple %s3, %s4, %s5, %s6
  %s8 = sld [smem:[#allocation0]]
  $region58: #{topk_router_forward.1} parent=0
    _
  %s10 = ssub.s32 1, %s8
  %s11 = scalar_select 0, %s10, %s8
  $region1: #{topk_router_forward.1} parent=0
    #allocation2 [shape = 'u8[4096]{0}', space=vmem, size = 0x1000, scoped, tag = 'input window, operand 0, single buffered']
    #allocation3 [shape = 's32[1]{0}', space=sflag, size = 0x4, scoped, tag = 'scoped memory for topk_router_forward.1']
    #allocation4 [shape = 'u8[16384]{0}', space=vmem, size = 0x4000, scoped, tag = 'input window, operand 1, single buffered']
    #allocation5 [shape = 's32[1]{0}', space=sflag, size = 0x4, scoped, tag = 'scoped memory for topk_router_forward.1']
    #allocation6 [shape = 'u8[512]{0}', space=vmem, size = 0x400, scoped, tag = 'input window, operand 2, single buffered']
    %12 = vsyncpa [#allocation3], 0
    %13 = vsyncpa [#allocation5], 0
    // Predicated region
    $region2: #{topk_router_forward.1} parent=1 // pred_check
      _
    $region3: #{topk_router_forward.1} parent=1 // pred_check_branch
      %15 = sbr.rel (0) target = $region5
    $region4: #{topk_router_forward.1} parent=1 // pred_region
      %s17 = ssub.s32 128, 128
      %18 = vsyncadd [#allocation3], %s17
      %s20 = sshll.u32 [#allocation2], 4
      %s21 = int_to_ptr.vmem [resolvable:$true] %s20
      %23 = dma.hbm_to_vmem [thread:$0]  %s0, 128, %s21, [#allocation3]
    $region5: #{topk_router_forward.1} parent=1 // pred_fallthru
      _
    // Predicated region
    $region6: #{topk_router_forward.1} parent=1 // pred_check
      _
    $region7: #{topk_router_forward.1} parent=1 // pred_check_branch
      %25 = sbr.rel (0) target = $region9
    $region8: #{topk_router_forward.1} parent=1 // pred_region
      %s27 = ssub.s32 512, 512
      %28 = vsyncadd [#allocation5], %s27
      %s29 = sshll.u32 [#allocation4], 4
      %s30 = int_to_ptr.vmem [resolvable:$true] %s29
      %35 = dma.hbm_to_vmem [thread:$0]  %s1, 512, %s30, [#allocation5], 128, 128, 8
    $region9: #{topk_router_forward.1} parent=1 // pred_fallthru
      _
    // Predicated region
    $region10: #{topk_router_forward.1} parent=1 // pred_check
      _
    $region11: #{topk_router_forward.1} parent=1 // pred_check_branch
      %37 = sbr.rel (0) target = $region13
    $region12: #{topk_router_forward.1} parent=1 // pred_region
      %s39 = ssub.s32 16, 16
      %40 = vsyncadd [#allocation5], %s39
      %s42 = sshll.u32 [#allocation6], 4
      %s43 = int_to_ptr.vmem [resolvable:$true] %s42
      %45 = dma.hbm_to_vmem [thread:$0]  %s2, 16, %s43, [#allocation5]
    $region13: #{topk_router_forward.1} parent=1 // pred_fallthru
      _
    // Predicated region
    $region14: #{topk_router_forward.1} parent=1 // pred_check
      _
    $region15: #{topk_router_forward.1} parent=1 // pred_check_branch
      %47 = sbr.rel (0) target = $region17
    $region16: #{topk_router_forward.1} parent=1 // pred_region
      %48 = dma.done [#allocation3], 128
    $region17: #{topk_router_forward.1} parent=1 // pred_fallthru
      _
    // Predicated region
    $region18: #{topk_router_forward.1} parent=1 // pred_check
      _
    $region19: #{topk_router_forward.1} parent=1 // pred_check_branch
      %50 = sbr.rel (0) target = $region21
    $region20: #{topk_router_forward.1} parent=1 // pred_region
      %51 = dma.done [#allocation5], 512
    $region21: #{topk_router_forward.1} parent=1 // pred_fallthru
      _
    // Predicated region
    $region22: #{topk_router_forward.1} parent=1 // pred_check
      _
    $region23: #{topk_router_forward.1} parent=1 // pred_check_branch
      %53 = sbr.rel (0) target = $region25
    $region24: #{topk_router_forward.1} parent=1 // pred_region
      %54 = dma.done [#allocation5], 16
    $region25: #{topk_router_forward.1} parent=1 // pred_fallthru
      _
    %v55 = vld [vmem:[#allocation2] sm:$0xff]
    %v56 = vld [vmem:[#allocation4] sm:$0xff]
    %v57 = vld [vmem:[#allocation4 + $0x8] sm:$0xff]
    %v58 = vld [vmem:[#allocation4 + $0x10] sm:$0xff]
    %v59 = vld [vmem:[#allocation4 + $0x18] sm:$0xff]
    %v60 = vld [vmem:[#allocation6] sm:$0x1]
    %v62 = vlaneseq
    %v63 = vshrl.u32 %v62, 7
    %v64 = vsub.s32 0, %v63
    %v65 = vrot.slane %v60, %v64
    %vm67 = vcmask 261120
    %v69 = vsel %vm67, %v55, 0
    %71 = vmatprep.subr.mxu0 0.0
    %72 = vmatpush1.msra.mxu0 %v56
    %73 = vmatprep.subr.mxu0 0.0
    %74 = vmatpush1.msra.mxu0 %v57
    %75 = vmatprep.subr.mxu0 0.0
    %76 = vmatpush1.msra.mxu0 %v58
    %77 = vmatprep.subr.mxu0 0.0
    %78 = vmatpush1.msra.mxu0 %v59
    %79 = vmatprep.subr.mxu0 0.0
    %80 = vmatpush1.msra.mxu0 0.0
    %81 = vmatprep.subr.mxu0 0.0
    %82 = vmatpush1.msra.mxu0 0.0
    %83 = vmatprep.subr.mxu0 0.0
    %84 = vmatpush1.msra.mxu0 0.0
    %85 = vmatprep.subr.mxu0 0.0
    %86 = vmatpush1.msra.mxu0 0.0
    %87 = vmatprep.subr.mxu0 0.0
    %88 = vmatpush1.msra.mxu0 0.0
    %89 = vmatprep.subr.mxu0 0.0
    %90 = vmatpush1.msra.mxu0 0.0
    %91 = vmatprep.subr.mxu0 0.0
    %92 = vmatpush1.msra.mxu0 0.0
    %93 = vmatprep.subr.mxu0 0.0
    %94 = vmatpush1.msra.mxu0 0.0
    %95 = vmatprep.subr.mxu0 0.0
    %96 = vmatpush1.msra.mxu0 0.0
    %97 = vmatprep.subr.mxu0 0.0
    %98 = vmatpush1.msra.mxu0 0.0
    %99 = vmatprep.subr.mxu0 0.0
    %100 = vmatpush1.msra.mxu0 0.0
    %101 = vmatprep.subr.mxu0 0.0
    %102 = vmatpush1.msra.mxu0 0.0
    %103 = vmatprep.subr.mxu0 0.0
    %104 = vmatpush1.msra.mxu0 0.0
    %105 = vmatprep.subr.mxu0 0.0
    %106 = vmatpush1.msra.mxu0 0.0
    %107 = vmatprep.subr.mxu0 0.0
    %108 = vmatpush1.msra.mxu0 0.0
    %109 = vmatprep.subr.mxu0 0.0
    %110 = vmatpush1.msra.mxu0 0.0
    %111 = vmatprep.subr.mxu0 0.0
    %112 = vmatpush1.msra.mxu0 0.0
    %113 = vmatprep.subr.mxu0 0.0
    %114 = vmatpush1.msra.mxu0 0.0
    %115 = vmatprep.subr.mxu0 0.0
    %116 = vmatpush1.msra.mxu0 0.0
    %117 = vmatprep.subr.mxu0 0.0
    %118 = vmatpush1.msra.mxu0 0.0
    %119 = vmatprep.subr.mxu0 0.0
    %120 = vmatpush1.msra.mxu0 0.0
    %121 = vmatprep.subr.mxu0 0.0
    %122 = vmatpush1.msra.mxu0 0.0
    %123 = vmatprep.subr.mxu0 0.0
    %124 = vmatpush1.msra.mxu0 0.0
    %125 = vmatprep.subr.mxu0 0.0
    %126 = vmatpush1.msra.mxu0 0.0
    %127 = vmatprep.subr.mxu0 0.0
    %128 = vmatpush1.msra.mxu0 0.0
    %129 = vmatprep.subr.mxu0 0.0
    %130 = vmatpush1.msra.mxu0 0.0
    %131 = vmatprep.subr.mxu0 0.0
    %132 = vmatpush1.msra.mxu0 0.0
    %133 = vmatprep.subr.mxu0 0.0
    %134 = vmatpush1.msra.mxu0 0.0
    %135 = vmatprep.mubr.f32.mxu0 0.0
    %136 = vmatmul.mubr.f32.gmra.mrb[0].mxu0 %v69
    %v137 = vpop.f32.mrb[0].mxu0
    %v138 = vadd.f32 %v65, %v137
    %v139 = vpop.f32.mrb[0].mxu0
    %140 = vdwg.mxu0
    %141 = vmax.xlane.f32.xlu0 %v138
    %v142 = vpop.xlane.xlu0 %141
    %v143 = vsub.f32 %v138, %v142
    %v144 = vmul.f32 %v143, 1.442695
    %v145 = vpow.pop %v144
    %146 = vadd.xlane.f32.xlu0 %v145
    %v147 = vpop.xlane.xlu0 %146
    %v148 = vrcp.pop %v147
    %v149 = vmul.f32 %v145, %v148
    %vm150 = vcmask 31744
    %151 = vst.msk [vmem:[%s3] sm:$0xff] %vm150, %v138
    %152 = vst.msk [vmem:[%s4] sm:$0xff] %vm150, %v149
    %v153 = vlaneseq
    %v154 = vand.u32 %v153, 127
    %155 = vmax.xlane.f32.xlu0 %v149
    %v156 = vpop.xlane.xlu0 %155
    %vm157 = vcmp.eq.f32.partialorder %v149, %v156
    %v158 = vsel %vm157, %v154, 128
    %v159 = vand.u32 %v158, 65535
    %v160 = vshra.s32 %v158, 16
    %v161 = vcvt.s32.f32 %v159
    %v162 = vcvt.s32.f32 %v160
    %163 = vmin.xlane.f32.xlu0 %v162
    %v164 = vpop.xlane.xlu0 %163
    %vm165 = vcmp.eq.f32.partialorder %v162, %v164
    %v166 = vsel %vm165, %v161, inf
    %167 = vmin.xlane.f32.xlu0 %v166
    %v168 = vpop.xlane.xlu0 %167
    %v169 = vcvt.f32.s32 %v168
    %v170 = vcvt.f32.s32 %v164
    %v171 = vshll.u32 %v170, 16
    %v172 = vadd.s32 %v171, %v169
    %vm173 = vcmp.eq.s32.totalorder %v154, %v172
    %v174 = vsel %vm173, -1.0, %v149
    %175 = vmax.xlane.f32.xlu0 %v174
    %v176 = vpop.xlane.xlu0 %175
    %vm177 = vcmp.eq.f32.partialorder %v174, %v176
    %v178 = vsel %vm177, %v154, 128
    %v179 = vand.u32 %v178, 65535
    %v180 = vshra.s32 %v178, 16
    %v181 = vcvt.s32.f32 %v179
    %v182 = vcvt.s32.f32 %v180
    %183 = vmin.xlane.f32.xlu0 %v182
    %v184 = vpop.xlane.xlu0 %183
    %vm185 = vcmp.eq.f32.partialorder %v182, %v184
    %v186 = vsel %vm185, %v181, inf
    %187 = vmin.xlane.f32.xlu0 %v186
    %v188 = vpop.xlane.xlu0 %187
    %v189 = vcvt.f32.s32 %v188
    %v190 = vcvt.f32.s32 %v184
    %v191 = vshll.u32 %v190, 16
    %v192 = vadd.s32 %v191, %v189
    %vm193 = vcmask 7168
    %v194 = vsel %vm193, %v156, %v176
    %vm195 = vcmask 15360
    %196 = vst.msk [vmem:[%s5] sm:$0xff] %vm195, %v194
    %v197 = vsel %vm193, %v172, %v192
    %198 = vst.msk [vmem:[%s6] sm:$0xff] %vm195, %v197
    // Predicated region
    $region26: #{topk_router_forward.1} parent=1 // pred_check
      _
    $region27: #{topk_router_forward.1} parent=1 // pred_check_branch
      %200 = sbr.rel (0) target = $region29
    $region28: #{topk_router_forward.1} parent=1 // pred_region
      _
    $region29: #{topk_router_forward.1} parent=1 // pred_fallthru
      _
    // Predicated region
    $region30: #{topk_router_forward.1} parent=1 // pred_check
      _
    $region31: #{topk_router_forward.1} parent=1 // pred_check_branch
      %202 = sbr.rel (0) target = $region33
    $region32: #{topk_router_forward.1} parent=1 // pred_region
      _
    $region33: #{topk_router_forward.1} parent=1 // pred_fallthru
      _
    // Predicated region
    $region34: #{topk_router_forward.1} parent=1 // pred_check
      _
    $region35: #{topk_router_forward.1} parent=1 // pred_check_branch
      %204 = sbr.rel (0) target = $region37
    $region36: #{topk_router_forward.1} parent=1 // pred_region
      _
    $region37: #{topk_router_forward.1} parent=1 // pred_fallthru
      _
    // Predicated region
    $region38: #{topk_router_forward.1} parent=1 // pred_check
      _
    $region39: #{topk_router_forward.1} parent=1 // pred_check_branch
      %206 = sbr.rel (0) target = $region41
    $region40: #{topk_router_forward.1} parent=1 // pred_region
      _
    $region41: #{topk_router_forward.1} parent=1 // pred_fallthru
      _
    // Predicated region
    $region42: #{topk_router_forward.1} parent=1 // pred_check
      _
    $region43: #{topk_router_forward.1} parent=1 // pred_check_branch
      %208 = sbr.rel (0) target = $region45
    $region44: #{topk_router_forward.1} parent=1 // pred_region
      _
    $region45: #{topk_router_forward.1} parent=1 // pred_fallthru
      _
    // Predicated region
    $region46: #{topk_router_forward.1} parent=1 // pred_check
      _
    $region47: #{topk_router_forward.1} parent=1 // pred_check_branch
      %210 = sbr.rel (0) target = $region49
    $region48: #{topk_router_forward.1} parent=1 // pred_region
      _
    $region49: #{topk_router_forward.1} parent=1 // pred_fallthru
      _
    // Predicated region
    $region50: #{topk_router_forward.1} parent=1 // pred_check
      _
    $region51: #{topk_router_forward.1} parent=1 // pred_check_branch
      %212 = sbr.rel (0) target = $region53
    $region52: #{topk_router_forward.1} parent=1 // pred_region
      _
    $region53: #{topk_router_forward.1} parent=1 // pred_fallthru
      _
    // Predicated region
    $region54: #{topk_router_forward.1} parent=1 // pred_check
      _
    $region55: #{topk_router_forward.1} parent=1 // pred_check_branch
      %214 = sbr.rel (0) target = $region57
    $region56: #{topk_router_forward.1} parent=1 // pred_region
      _
    $region57: #{topk_router_forward.1} parent=1 // pred_fallthru
      _
    %215 = vsyncpa [#allocation3], 1
    %216 = vsyncpa [#allocation5], 1

</llo_original>
